<compile_context>
chip_gen: v5e
topology: v5e:2x2
jax: 0.10.0
libtpu: 0.0.40
codegen_flags: <defaults>
</compile_context>

<pallas_src>
import jax
import jax.numpy as jnp
from jax.experimental import pallas as pl
from jax.experimental.pallas import tpu as pltpu


def _sigmoid_via_tanh(z):
    # 1 EUP transcendental (tanh) instead of exp + reciprocal (2 pushes).
    return 0.5 * jnp.tanh(0.5 * z) + 0.5


def _bilstm_kernel(x_ref,            # (T*B, E)  bf16, time-major rows
                   wih_f_ref,        # (E, 4H)   bf16
                   whh_f_ref,        # (H, 4H)   bf16
                   b_f_ref,          # (1, 4H)   f32   (b_ih + b_hh, forward)
                   wih_b_ref,        # (E, 4H)   bf16
                   b_b_ref,          # (1, 4H)   f32   (b_ih + b_hh, backward)
                   wout_f_ref,       # (H, E)    bf16  (W rows acting on h_fwd)
                   wout_b_ref,       # (H, E)    bf16  (W rows acting on h_bwd)
                   bout_ref,         # (1, E)    f32
                   o_ref,            # (B, E)    f32
                   gproj_ref):       # (T*B, 4H) f32 VMEM scratch
    TB, _ = x_ref.shape
    B, _ = o_ref.shape
    T = TB // B
    H = whh_f_ref.shape[0]

    # ---- Hoisted input projection: one large MXU matmul, bias folded in. ----
    gproj_ref[...] = (
        jnp.dot(x_ref[...], wih_f_ref[...], preferred_element_type=jnp.float32)
        + b_f_ref[...])

    # ---- Forward recurrence (the only serial part): h @ W_hh per step. ------
    whh_f = whh_f_ref[...]            # hoisted load, loop-invariant

    def step(t, carry):
        h, c = carry
        row = pl.multiple_of(t * B, B)
        gates = gproj_ref[pl.ds(row, B), :] + jnp.dot(
            h.astype(jnp.bfloat16), whh_f, preferred_element_type=jnp.float32)
        i = _sigmoid_via_tanh(gates[:, 0 * H:1 * H])
        f = _sigmoid_via_tanh(gates[:, 1 * H:2 * H])
        g = jnp.tanh(gates[:, 2 * H:3 * H])
        o = _sigmoid_via_tanh(gates[:, 3 * H:4 * H])
        c_new = f * c + i * g
        h_new = o * jnp.tanh(c_new)
        return h_new, c_new

    h0 = jnp.zeros((B, H), jnp.float32)
    c0 = jnp.zeros((B, H), jnp.float32)
    h_fwd, _ = jax.lax.fori_loop(0, T, step, (h0, c0), unroll=True)

    # ---- Backward direction: outputs[-1] only needs h_bwd at time T-1, i.e.
    # a single cell step on x[T-1] from a zero state.  With h = c = 0 the
    # W_hh_bwd term vanishes and the forget gate is irrelevant. ---------------
    gb = (jnp.dot(x_ref[(T - 1) * B:T * B, :], wih_b_ref[...],
                  preferred_element_type=jnp.float32)
          + b_b_ref[...])
    i_b = _sigmoid_via_tanh(gb[:, 0 * H:1 * H])
    g_b = jnp.tanh(gb[:, 2 * H:3 * H])
    o_b = _sigmoid_via_tanh(gb[:, 3 * H:4 * H])
    h_bwd = o_b * jnp.tanh(i_b * g_b)

    # ---- Fused output projection: [h_fwd ; h_bwd] @ W + b. ------------------
    out = (jnp.dot(h_fwd.astype(jnp.bfloat16), wout_f_ref[...],
                   preferred_element_type=jnp.float32)
           + jnp.dot(h_bwd.astype(jnp.bfloat16), wout_b_ref[...],
                     preferred_element_type=jnp.float32)
           + bout_ref[...])
    o_ref[...] = out.astype(o_ref.dtype)


def bilstm_forward(X, params):
    """X: (batch, seq_len, embedding_dim) float32 -> (batch, embedding_dim)."""
    B, T, E = X.shape
    H = params["hidden_dim"]
    bf16 = jnp.bfloat16
    f32 = jnp.float32

    # The module does X.transpose(0, 1) -> time-major.  Flatten (T, B) into the
    # row dim so the hoisted input projection is a single (T*B, E)@(E, 4H) dot.
    x = jnp.transpose(X, (1, 0, 2)).reshape(T * B, E).astype(bf16)

    args = (
        x,
        params["wih_f"].astype(bf16),
        params["whh_f"].astype(bf16),
        params["b_f"].astype(f32),
        params["wih_b"].astype(bf16),
        params["b_b"].astype(f32),
        params["wout_f"].astype(bf16),
        params["wout_b"].astype(bf16),
        params["bout"].astype(f32),
    )
    return pl.pallas_call(
        _bilstm_kernel,
        out_shape=jax.ShapeDtypeStruct((B, E), f32),
        in_specs=[pl.BlockSpec(memory_space=pltpu.MemorySpace.VMEM)] * len(args),
        out_specs=pl.BlockSpec(memory_space=pltpu.MemorySpace.VMEM),
        scratch_shapes=[pltpu.VMEM((T * B, 4 * H), f32)],
        compiler_params=pltpu.CompilerParams(
            vmem_limit_bytes=32 * 1024 * 1024),
    )(*args)


def bilstm_reference(X, params):
    """Pure-JAX reference (lax.scan, f32) mirroring nn.LSTM(bidirectional=True)."""
    B, T, E = X.shape
    H = params["hidden_dim"]
    x = jnp.transpose(X, (1, 0, 2)).astype(jnp.float32)

    def make_step(wih, whh, b):
        def step(carry, xt):
            h, c = carry
            gates = xt @ wih + h @ whh + b
            i = jax.nn.sigmoid(gates[:, 0 * H:1 * H])
            f = jax.nn.sigmoid(gates[:, 1 * H:2 * H])
            g = jnp.tanh(gates[:, 2 * H:3 * H])
            o = jax.nn.sigmoid(gates[:, 3 * H:4 * H])
            c = f * c + i * g
            h = o * jnp.tanh(c)
            return (h, c), h
        return step

    zeros = (jnp.zeros((B, H), jnp.float32), jnp.zeros((B, H), jnp.float32))
    _, hs_f = jax.lax.scan(make_step(params["wih_f"], params["whh_f"], params["b_f"]), zeros, x)
    _, hs_b = jax.lax.scan(make_step(params["wih_b"], params["whh_b"], params["b_b"]), zeros, x[::-1])
    hs_b = hs_b[::-1]
    last = jnp.concatenate([hs_f[-1], hs_b[-1]], axis=-1)   # outputs[-1], (B, 2H)
    w_out = jnp.concatenate([params["wout_f"], params["wout_b"]], axis=0)  # (2H, E)
    return last @ w_out + params["bout"]


def make_params(key, E, H):
    """Deterministic synthetic parameters matching nn.LSTM / nn.Linear shapes."""
    ks = jax.random.split(key, 9)
    s = 1.0 / jnp.sqrt(H)
    u = lambda k, shape: jax.random.uniform(k, shape, jnp.float32, -s, s)
    return {
        "hidden_dim": H,
        # LSTM weights stored pre-transposed for x @ W: (E,4H)/(H,4H), gates i,f,g,o
        "wih_f": u(ks[0], (E, 4 * H)),
        "whh_f": u(ks[1], (H, 4 * H)),
        "b_f":   u(ks[2], (1, 4 * H)) + u(ks[3], (1, 4 * H)),   # b_ih + b_hh
        "wih_b": u(ks[4], (E, 4 * H)),
        "whh_b": u(ks[5], (H, 4 * H)),   # used by the reference only; the kernel
                                         # never needs it (h_bwd(T-1) starts from 0)
        "b_b":   u(ks[6], (1, 4 * H)) + u(ks[7], (1, 4 * H)),
        # Linear(2H -> E, bias=False), transposed; split into fwd/bwd halves
        "wout_f": u(ks[8], (2 * H, E))[:H],
        "wout_b": u(ks[8], (2 * H, E))[H:],
        # self.b = nn.Parameter(torch.ones([embedding_dim]))
        "bout": jnp.ones((1, E), jnp.float32),
    }


if __name__ == "__main__":
    B, T, E, H = 2, 8, 16, 32
    key = jax.random.PRNGKey(0)
    kx, kp = jax.random.split(key)
    X = jax.random.normal(kx, (B, T, E), jnp.float32)
    params = make_params(kp, E, H)

    out = jax.block_until_ready(bilstm_forward(X, params))
    ref = jax.block_until_ready(bilstm_reference(X, params))

    assert out.shape == (B, E), out.shape
    err = jnp.max(jnp.abs(out - ref))
    # bf16 MXU operands in the kernel vs f32 reference -> loosened tolerance.
    assert jnp.allclose(out, ref, atol=5e-2, rtol=5e-2), f"max abs err {err}"
    print("KERNEL_OK")
</pallas_src>

<mosaic_0001>
module attributes {stable_mosaic.version = 11 : i64} {
  func.func @_bilstm_kernel(%arg0: memref<16x16xbf16, #tpu.memory_space<vmem>>, %arg1: memref<16x128xbf16, #tpu.memory_space<vmem>>, %arg2: memref<32x128xbf16, #tpu.memory_space<vmem>>, %arg3: memref<1x128xf32, #tpu.memory_space<vmem>>, %arg4: memref<16x128xbf16, #tpu.memory_space<vmem>>, %arg5: memref<1x128xf32, #tpu.memory_space<vmem>>, %arg6: memref<32x16xbf16, #tpu.memory_space<vmem>>, %arg7: memref<32x16xbf16, #tpu.memory_space<vmem>>, %arg8: memref<1x16xf32, #tpu.memory_space<vmem>>, %arg9: memref<2x16xf32, #tpu.memory_space<vmem>>, %arg10: memref<16x128xf32, #tpu.memory_space<vmem>>) attributes {dimension_semantics = [], scalar_prefetch = 0 : i64, scratch_operands = 1 : i64, tpu.core_type = #tpu.core_type<tc>} {
    %c0 = arith.constant 0 : index
    %c0_0 = arith.constant 0 : index
    %0 = vector.load %arg0[%c0, %c0_0] : memref<16x16xbf16, #tpu.memory_space<vmem>>, vector<16x16xbf16>
    %c0_1 = arith.constant 0 : index
    %c0_2 = arith.constant 0 : index
    %1 = vector.load %arg1[%c0_1, %c0_2] : memref<16x128xbf16, #tpu.memory_space<vmem>>, vector<16x128xbf16>
    %cst = arith.constant dense<0.000000e+00> : vector<16x128xf32>
    %2 = tpu.matmul %0, %1, %cst {dimension_numbers = #tpu.dot_dimension_numbers<[1], [0], [0], [1], [0, 0, 1, 1], [], []>} : vector<16x16xbf16>, vector<16x128xbf16>, vector<16x128xf32> -> vector<16x128xf32>
    %c0_3 = arith.constant 0 : index
    %c0_4 = arith.constant 0 : index
    %3 = vector.load %arg3[%c0_3, %c0_4] : memref<1x128xf32, #tpu.memory_space<vmem>>, vector<1x128xf32>
    %4 = vector.broadcast %3 : vector<1x128xf32> to vector<16x128xf32>
    %5 = arith.addf %2, %4 : vector<16x128xf32>
    %c0_5 = arith.constant 0 : index
    %c0_6 = arith.constant 0 : index
    %6 = vector.load %arg10[%c0_5, %c0_6] : memref<16x128xf32, #tpu.memory_space<vmem>>, vector<16x128xf32>
    tpu.vector_store %arg10[%c0_5, %c0_6], %5 {strides = array<i32>} : memref<16x128xf32, #tpu.memory_space<vmem>>, vector<16x128xf32>,
    %c0_7 = arith.constant 0 : index
    %c0_8 = arith.constant 0 : index
    %7 = vector.load %arg2[%c0_7, %c0_8] : memref<32x128xbf16, #tpu.memory_space<vmem>>, vector<32x128xbf16>
    %cst_9 = arith.constant 0.000000e+00 : f32
    %8 = vector.broadcast %cst_9 : f32 to vector<2x32xf32>
    %cst_10 = arith.constant 0.000000e+00 : f32
    %9 = vector.broadcast %cst_10 : f32 to vector<2x32xf32>
    %c0_i32 = arith.constant 0 : i32
    %c2_i32 = arith.constant 2 : i32
    %10 = arith.muli %c0_i32, %c2_i32 : i32
    %11 = tpu.assume_multiple %10, 2 : i32
    %12 = arith.index_cast %11 : i32 to index
    %c0_11 = arith.constant 0 : index
    %13 = vector.load %arg10[%12, %c0_11] : memref<16x128xf32, #tpu.memory_space<vmem>>, vector<2x128xf32>
    %14 = arith.truncf %8 : vector<2x32xf32> to vector<2x32xbf16>
    %cst_12 = arith.constant dense<0.000000e+00> : vector<2x128xf32>
    %15 = tpu.matmul %14, %7, %cst_12 {dimension_numbers = #tpu.dot_dimension_numbers<[1], [0], [0], [1], [0, 0, 1, 1], [], []>} : vector<2x32xbf16>, vector<32x128xbf16>, vector<2x128xf32> -> vector<2x128xf32>
    %16 = arith.addf %13, %15 : vector<2x128xf32>
    %17 = vector.extract_strided_slice %16 {offsets = [0, 0], sizes = [2, 32], strides = [1, 1]} : vector<2x128xf32> to vector<2x32xf32>
    %cst_13 = arith.constant 5.000000e-01 : f32
    %18 = vector.broadcast %cst_13 : f32 to vector<2x32xf32>
    %19 = arith.mulf %18, %17 : vector<2x32xf32>
    %20 = math.tanh %19 : vector<2x32xf32>
    %cst_14 = arith.constant 5.000000e-01 : f32
    %21 = vector.broadcast %cst_14 : f32 to vector<2x32xf32>
    %22 = arith.mulf %21, %20 : vector<2x32xf32>
    %cst_15 = arith.constant 5.000000e-01 : f32
    %23 = vector.broadcast %cst_15 : f32 to vector<2x32xf32>
    %24 = arith.addf %22, %23 : vector<2x32xf32>
    %25 = vector.extract_strided_slice %16 {offsets = [0, 32], sizes = [2, 32], strides = [1, 1]} : vector<2x128xf32> to vector<2x32xf32>
    %cst_16 = arith.constant 5.000000e-01 : f32
    %26 = vector.broadcast %cst_16 : f32 to vector<2x32xf32>
    %27 = arith.mulf %26, %25 : vector<2x32xf32>
    %28 = math.tanh %27 : vector<2x32xf32>
    %cst_17 = arith.constant 5.000000e-01 : f32
    %29 = vector.broadcast %cst_17 : f32 to vector<2x32xf32>
    %30 = arith.mulf %29, %28 : vector<2x32xf32>
    %cst_18 = arith.constant 5.000000e-01 : f32
    %31 = vector.broadcast %cst_18 : f32 to vector<2x32xf32>
    %32 = arith.addf %30, %31 : vector<2x32xf32>
    %33 = vector.extract_strided_slice %16 {offsets = [0, 64], sizes = [2, 32], strides = [1, 1]} : vector<2x128xf32> to vector<2x32xf32>
    %34 = math.tanh %33 : vector<2x32xf32>
    %35 = vector.extract_strided_slice %16 {offsets = [0, 96], sizes = [2, 32], strides = [1, 1]} : vector<2x128xf32> to vector<2x32xf32>
    %cst_19 = arith.constant 5.000000e-01 : f32
    %36 = vector.broadcast %cst_19 : f32 to vector<2x32xf32>
    %37 = arith.mulf %36, %35 : vector<2x32xf32>
    %38 = math.tanh %37 : vector<2x32xf32>
    %cst_20 = arith.constant 5.000000e-01 : f32
    %39 = vector.broadcast %cst_20 : f32 to vector<2x32xf32>
    %40 = arith.mulf %39, %38 : vector<2x32xf32>
    %cst_21 = arith.constant 5.000000e-01 : f32
    %41 = vector.broadcast %cst_21 : f32 to vector<2x32xf32>
    %42 = arith.addf %40, %41 : vector<2x32xf32>
    %43 = arith.mulf %32, %9 : vector<2x32xf32>
    %44 = arith.mulf %24, %34 : vector<2x32xf32>
    %45 = arith.addf %43, %44 : vector<2x32xf32>
    %46 = math.tanh %45 : vector<2x32xf32>
    %47 = arith.mulf %42, %46 : vector<2x32xf32>
    %c1_i32 = arith.constant 1 : i32
    %c2_i32_22 = arith.constant 2 : i32
    %48 = arith.muli %c1_i32, %c2_i32_22 : i32
    %49 = tpu.assume_multiple %48, 2 : i32
    %50 = arith.index_cast %49 : i32 to index
    %c0_23 = arith.constant 0 : index
    %51 = vector.load %arg10[%50, %c0_23] : memref<16x128xf32, #tpu.memory_space<vmem>>, vector<2x128xf32>
    %52 = arith.truncf %47 : vector<2x32xf32> to vector<2x32xbf16>
    %cst_24 = arith.constant dense<0.000000e+00> : vector<2x128xf32>
    %53 = tpu.matmul %52, %7, %cst_24 {dimension_numbers = #tpu.dot_dimension_numbers<[1], [0], [0], [1], [0, 0, 1, 1], [], []>} : vector<2x32xbf16>, vector<32x128xbf16>, vector<2x128xf32> -> vector<2x128xf32>
    %54 = arith.addf %51, %53 : vector<2x128xf32>
    %55 = vector.extract_strided_slice %54 {offsets = [0, 0], sizes = [2, 32], strides = [1, 1]} : vector<2x128xf32> to vector<2x32xf32>
    %cst_25 = arith.constant 5.000000e-01 : f32
    %56 = vector.broadcast %cst_25 : f32 to vector<2x32xf32>
    %57 = arith.mulf %56, %55 : vector<2x32xf32>
    %58 = math.tanh %57 : vector<2x32xf32>
    %cst_26 = arith.constant 5.000000e-01 : f32
    %59 = vector.broadcast %cst_26 : f32 to vector<2x32xf32>
    %60 = arith.mulf %59, %58 : vector<2x32xf32>
    %cst_27 = arith.constant 5.000000e-01 : f32
    %61 = vector.broadcast %cst_27 : f32 to vector<2x32xf32>
    %62 = arith.addf %60, %61 : vector<2x32xf32>
    %63 = vector.extract_strided_slice %54 {offsets = [0, 32], sizes = [2, 32], strides = [1, 1]} : vector<2x128xf32> to vector<2x32xf32>
    %cst_28 = arith.constant 5.000000e-01 : f32
    %64 = vector.broadcast %cst_28 : f32 to vector<2x32xf32>
    %65 = arith.mulf %64, %63 : vector<2x32xf32>
    %66 = math.tanh %65 : vector<2x32xf32>
    %cst_29 = arith.constant 5.000000e-01 : f32
    %67 = vector.broadcast %cst_29 : f32 to vector<2x32xf32>
    %68 = arith.mulf %67, %66 : vector<2x32xf32>
    %cst_30 = arith.constant 5.000000e-01 : f32
    %69 = vector.broadcast %cst_30 : f32 to vector<2x32xf32>
    %70 = arith.addf %68, %69 : vector<2x32xf32>
    %71 = vector.extract_strided_slice %54 {offsets = [0, 64], sizes = [2, 32], strides = [1, 1]} : vector<2x128xf32> to vector<2x32xf32>
    %72 = math.tanh %71 : vector<2x32xf32>
    %73 = vector.extract_strided_slice %54 {offsets = [0, 96], sizes = [2, 32], strides = [1, 1]} : vector<2x128xf32> to vector<2x32xf32>
    %cst_31 = arith.constant 5.000000e-01 : f32
    %74 = vector.broadcast %cst_31 : f32 to vector<2x32xf32>
    %75 = arith.mulf %74, %73 : vector<2x32xf32>
    %76 = math.tanh %75 : vector<2x32xf32>
    %cst_32 = arith.constant 5.000000e-01 : f32
    %77 = vector.broadcast %cst_32 : f32 to vector<2x32xf32>
    %78 = arith.mulf %77, %76 : vector<2x32xf32>
    %cst_33 = arith.constant 5.000000e-01 : f32
    %79 = vector.broadcast %cst_33 : f32 to vector<2x32xf32>
    %80 = arith.addf %78, %79 : vector<2x32xf32>
    %81 = arith.mulf %70, %45 : vector<2x32xf32>
    %82 = arith.mulf %62, %72 : vector<2x32xf32>
    %83 = arith.addf %81, %82 : vector<2x32xf32>
    %84 = math.tanh %83 : vector<2x32xf32>
    %85 = arith.mulf %80, %84 : vector<2x32xf32>
    %c2_i32_34 = arith.constant 2 : i32
    %c2_i32_35 = arith.constant 2 : i32
    %86 = arith.muli %c2_i32_34, %c2_i32_35 : i32
    %87 = tpu.assume_multiple %86, 2 : i32
    %88 = arith.index_cast %87 : i32 to index
    %c0_36 = arith.constant 0 : index
    %89 = vector.load %arg10[%88, %c0_36] : memref<16x128xf32, #tpu.memory_space<vmem>>, vector<2x128xf32>
    %90 = arith.truncf %85 : vector<2x32xf32> to vector<2x32xbf16>
    %cst_37 = arith.constant dense<0.000000e+00> : vector<2x128xf32>
    %91 = tpu.matmul %90, %7, %cst_37 {dimension_numbers = #tpu.dot_dimension_numbers<[1], [0], [0], [1], [0, 0, 1, 1], [], []>} : vector<2x32xbf16>, vector<32x128xbf16>, vector<2x128xf32> -> vector<2x128xf32>
    %92 = arith.addf %89, %91 : vector<2x128xf32>
    %93 = vector.extract_strided_slice %92 {offsets = [0, 0], sizes = [2, 32], strides = [1, 1]} : vector<2x128xf32> to vector<2x32xf32>
    %cst_38 = arith.constant 5.000000e-01 : f32
    %94 = vector.broadcast %cst_38 : f32 to vector<2x32xf32>
    %95 = arith.mulf %94, %93 : vector<2x32xf32>
    %96 = math.tanh %95 : vector<2x32xf32>
    %cst_39 = arith.constant 5.000000e-01 : f32
    %97 = vector.broadcast %cst_39 : f32 to vector<2x32xf32>
    %98 = arith.mulf %97, %96 : vector<2x32xf32>
    %cst_40 = arith.constant 5.000000e-01 : f32
    %99 = vector.broadcast %cst_40 : f32 to vector<2x32xf32>
    %100 = arith.addf %98, %99 : vector<2x32xf32>
    %101 = vector.extract_strided_slice %92 {offsets = [0, 32], sizes = [2, 32], strides = [1, 1]} : vector<2x128xf32> to vector<2x32xf32>
    %cst_41 = arith.constant 5.000000e-01 : f32
    %102 = vector.broadcast %cst_41 : f32 to vector<2x32xf32>
    %103 = arith.mulf %102, %101 : vector<2x32xf32>
    %104 = math.tanh %103 : vector<2x32xf32>
    %cst_42 = arith.constant 5.000000e-01 : f32
    %105 = vector.broadcast %cst_42 : f32 to vector<2x32xf32>
    %106 = arith.mulf %105, %104 : vector<2x32xf32>
    %cst_43 = arith.constant 5.000000e-01 : f32
    %107 = vector.broadcast %cst_43 : f32 to vector<2x32xf32>
    %108 = arith.addf %106, %107 : vector<2x32xf32>
    %109 = vector.extract_strided_slice %92 {offsets = [0, 64], sizes = [2, 32], strides = [1, 1]} : vector<2x128xf32> to vector<2x32xf32>
    %110 = math.tanh %109 : vector<2x32xf32>
    %111 = vector.extract_strided_slice %92 {offsets = [0, 96], sizes = [2, 32], strides = [1, 1]} : vector<2x128xf32> to vector<2x32xf32>
    %cst_44 = arith.constant 5.000000e-01 : f32
    %112 = vector.broadcast %cst_44 : f32 to vector<2x32xf32>
    %113 = arith.mulf %112, %111 : vector<2x32xf32>
    %114 = math.tanh %113 : vector<2x32xf32>
    %cst_45 = arith.constant 5.000000e-01 : f32
    %115 = vector.broadcast %cst_45 : f32 to vector<2x32xf32>
    %116 = arith.mulf %115, %114 : vector<2x32xf32>
    %cst_46 = arith.constant 5.000000e-01 : f32
    %117 = vector.broadcast %cst_46 : f32 to vector<2x32xf32>
    %118 = arith.addf %116, %117 : vector<2x32xf32>
    %119 = arith.mulf %108, %83 : vector<2x32xf32>
    %120 = arith.mulf %100, %110 : vector<2x32xf32>
    %121 = arith.addf %119, %120 : vector<2x32xf32>
    %122 = math.tanh %121 : vector<2x32xf32>
    %123 = arith.mulf %118, %122 : vector<2x32xf32>
    %c3_i32 = arith.constant 3 : i32
    %c2_i32_47 = arith.constant 2 : i32
    %124 = arith.muli %c3_i32, %c2_i32_47 : i32
    %125 = tpu.assume_multiple %124, 2 : i32
    %126 = arith.index_cast %125 : i32 to index
    %c0_48 = arith.constant 0 : index
    %127 = vector.load %arg10[%126, %c0_48] : memref<16x128xf32, #tpu.memory_space<vmem>>, vector<2x128xf32>
    %128 = arith.truncf %123 : vector<2x32xf32> to vector<2x32xbf16>
    %cst_49 = arith.constant dense<0.000000e+00> : vector<2x128xf32>
    %129 = tpu.matmul %128, %7, %cst_49 {dimension_numbers = #tpu.dot_dimension_numbers<[1], [0], [0], [1], [0, 0, 1, 1], [], []>} : vector<2x32xbf16>, vector<32x128xbf16>, vector<2x128xf32> -> vector<2x128xf32>
    %130 = arith.addf %127, %129 : vector<2x128xf32>
    %131 = vector.extract_strided_slice %130 {offsets = [0, 0], sizes = [2, 32], strides = [1, 1]} : vector<2x128xf32> to vector<2x32xf32>
    %cst_50 = arith.constant 5.000000e-01 : f32
    %132 = vector.broadcast %cst_50 : f32 to vector<2x32xf32>
    %133 = arith.mulf %132, %131 : vector<2x32xf32>
    %134 = math.tanh %133 : vector<2x32xf32>
    %cst_51 = arith.constant 5.000000e-01 : f32
    %135 = vector.broadcast %cst_51 : f32 to vector<2x32xf32>
    %136 = arith.mulf %135, %134 : vector<2x32xf32>
    %cst_52 = arith.constant 5.000000e-01 : f32
    %137 = vector.broadcast %cst_52 : f32 to vector<2x32xf32>
    %138 = arith.addf %136, %137 : vector<2x32xf32>
    %139 = vector.extract_strided_slice %130 {offsets = [0, 32], sizes = [2, 32], strides = [1, 1]} : vector<2x128xf32> to vector<2x32xf32>
    %cst_53 = arith.constant 5.000000e-01 : f32
    %140 = vector.broadcast %cst_53 : f32 to vector<2x32xf32>
    %141 = arith.mulf %140, %139 : vector<2x32xf32>
    %142 = math.tanh %141 : vector<2x32xf32>
    %cst_54 = arith.constant 5.000000e-01 : f32
    %143 = vector.broadcast %cst_54 : f32 to vector<2x32xf32>
    %144 = arith.mulf %143, %142 : vector<2x32xf32>
    %cst_55 = arith.constant 5.000000e-01 : f32
    %145 = vector.broadcast %cst_55 : f32 to vector<2x32xf32>
    %146 = arith.addf %144, %145 : vector<2x32xf32>
    %147 = vector.extract_strided_slice %130 {offsets = [0, 64], sizes = [2, 32], strides = [1, 1]} : vector<2x128xf32> to vector<2x32xf32>
    %148 = math.tanh %147 : vector<2x32xf32>
    %149 = vector.extract_strided_slice %130 {offsets = [0, 96], sizes = [2, 32], strides = [1, 1]} : vector<2x128xf32> to vector<2x32xf32>
    %cst_56 = arith.constant 5.000000e-01 : f32
    %150 = vector.broadcast %cst_56 : f32 to vector<2x32xf32>
    %151 = arith.mulf %150, %149 : vector<2x32xf32>
    %152 = math.tanh %151 : vector<2x32xf32>
    %cst_57 = arith.constant 5.000000e-01 : f32
    %153 = vector.broadcast %cst_57 : f32 to vector<2x32xf32>
    %154 = arith.mulf %153, %152 : vector<2x32xf32>
    %cst_58 = arith.constant 5.000000e-01 : f32
    %155 = vector.broadcast %cst_58 : f32 to vector<2x32xf32>
    %156 = arith.addf %154, %155 : vector<2x32xf32>
    %157 = arith.mulf %146, %121 : vector<2x32xf32>
    %158 = arith.mulf %138, %148 : vector<2x32xf32>
    %159 = arith.addf %157, %158 : vector<2x32xf32>
    %160 = math.tanh %159 : vector<2x32xf32>
    %161 = arith.mulf %156, %160 : vector<2x32xf32>
    %c4_i32 = arith.constant 4 : i32
    %c2_i32_59 = arith.constant 2 : i32
    %162 = arith.muli %c4_i32, %c2_i32_59 : i32
    %163 = tpu.assume_multiple %162, 2 : i32
    %164 = arith.index_cast %163 : i32 to index
    %c0_60 = arith.constant 0 : index
    %165 = vector.load %arg10[%164, %c0_60] : memref<16x128xf32, #tpu.memory_space<vmem>>, vector<2x128xf32>
    %166 = arith.truncf %161 : vector<2x32xf32> to vector<2x32xbf16>
    %cst_61 = arith.constant dense<0.000000e+00> : vector<2x128xf32>
    %167 = tpu.matmul %166, %7, %cst_61 {dimension_numbers = #tpu.dot_dimension_numbers<[1], [0], [0], [1], [0, 0, 1, 1], [], []>} : vector<2x32xbf16>, vector<32x128xbf16>, vector<2x128xf32> -> vector<2x128xf32>
    %168 = arith.addf %165, %167 : vector<2x128xf32>
    %169 = vector.extract_strided_slice %168 {offsets = [0, 0], sizes = [2, 32], strides = [1, 1]} : vector<2x128xf32> to vector<2x32xf32>
    %cst_62 = arith.constant 5.000000e-01 : f32
    %170 = vector.broadcast %cst_62 : f32 to vector<2x32xf32>
    %171 = arith.mulf %170, %169 : vector<2x32xf32>
    %172 = math.tanh %171 : vector<2x32xf32>
    %cst_63 = arith.constant 5.000000e-01 : f32
    %173 = vector.broadcast %cst_63 : f32 to vector<2x32xf32>
    %174 = arith.mulf %173, %172 : vector<2x32xf32>
    %cst_64 = arith.constant 5.000000e-01 : f32
    %175 = vector.broadcast %cst_64 : f32 to vector<2x32xf32>
    %176 = arith.addf %174, %175 : vector<2x32xf32>
    %177 = vector.extract_strided_slice %168 {offsets = [0, 32], sizes = [2, 32], strides = [1, 1]} : vector<2x128xf32> to vector<2x32xf32>
    %cst_65 = arith.constant 5.000000e-01 : f32
    %178 = vector.broadcast %cst_65 : f32 to vector<2x32xf32>
    %179 = arith.mulf %178, %177 : vector<2x32xf32>
    %180 = math.tanh %179 : vector<2x32xf32>
    %cst_66 = arith.constant 5.000000e-01 : f32
    %181 = vector.broadcast %cst_66 : f32 to vector<2x32xf32>
    %182 = arith.mulf %181, %180 : vector<2x32xf32>
    %cst_67 = arith.constant 5.000000e-01 : f32
    %183 = vector.broadcast %cst_67 : f32 to vector<2x32xf32>
    %184 = arith.addf %182, %183 : vector<2x32xf32>
    %185 = vector.extract_strided_slice %168 {offsets = [0, 64], sizes = [2, 32], strides = [1, 1]} : vector<2x128xf32> to vector<2x32xf32>
    %186 = math.tanh %185 : vector<2x32xf32>
    %187 = vector.extract_strided_slice %168 {offsets = [0, 96], sizes = [2, 32], strides = [1, 1]} : vector<2x128xf32> to vector<2x32xf32>
    %cst_68 = arith.constant 5.000000e-01 : f32
    %188 = vector.broadcast %cst_68 : f32 to vector<2x32xf32>
    %189 = arith.mulf %188, %187 : vector<2x32xf32>
    %190 = math.tanh %189 : vector<2x32xf32>
    %cst_69 = arith.constant 5.000000e-01 : f32
    %191 = vector.broadcast %cst_69 : f32 to vector<2x32xf32>
    %192 = arith.mulf %191, %190 : vector<2x32xf32>
    %cst_70 = arith.constant 5.000000e-01 : f32
    %193 = vector.broadcast %cst_70 : f32 to vector<2x32xf32>
    %194 = arith.addf %192, %193 : vector<2x32xf32>
    %195 = arith.mulf %184, %159 : vector<2x32xf32>
    %196 = arith.mulf %176, %186 : vector<2x32xf32>
    %197 = arith.addf %195, %196 : vector<2x32xf32>
    %198 = math.tanh %197 : vector<2x32xf32>
    %199 = arith.mulf %194, %198 : vector<2x32xf32>
    %c5_i32 = arith.constant 5 : i32
    %c2_i32_71 = arith.constant 2 : i32
    %200 = arith.muli %c5_i32, %c2_i32_71 : i32
    %201 = tpu.assume_multiple %200, 2 : i32
    %202 = arith.index_cast %201 : i32 to index
    %c0_72 = arith.constant 0 : index
    %203 = vector.load %arg10[%202, %c0_72] : memref<16x128xf32, #tpu.memory_space<vmem>>, vector<2x128xf32>
    %204 = arith.truncf %199 : vector<2x32xf32> to vector<2x32xbf16>
    %cst_73 = arith.constant dense<0.000000e+00> : vector<2x128xf32>
    %205 = tpu.matmul %204, %7, %cst_73 {dimension_numbers = #tpu.dot_dimension_numbers<[1], [0], [0], [1], [0, 0, 1, 1], [], []>} : vector<2x32xbf16>, vector<32x128xbf16>, vector<2x128xf32> -> vector<2x128xf32>
    %206 = arith.addf %203, %205 : vector<2x128xf32>
    %207 = vector.extract_strided_slice %206 {offsets = [0, 0], sizes = [2, 32], strides = [1, 1]} : vector<2x128xf32> to vector<2x32xf32>
    %cst_74 = arith.constant 5.000000e-01 : f32
    %208 = vector.broadcast %cst_74 : f32 to vector<2x32xf32>
    %209 = arith.mulf %208, %207 : vector<2x32xf32>
    %210 = math.tanh %209 : vector<2x32xf32>
    %cst_75 = arith.constant 5.000000e-01 : f32
    %211 = vector.broadcast %cst_75 : f32 to vector<2x32xf32>
    %212 = arith.mulf %211, %210 : vector<2x32xf32>
    %cst_76 = arith.constant 5.000000e-01 : f32
    %213 = vector.broadcast %cst_76 : f32 to vector<2x32xf32>
    %214 = arith.addf %212, %213 : vector<2x32xf32>
    %215 = vector.extract_strided_slice %206 {offsets = [0, 32], sizes = [2, 32], strides = [1, 1]} : vector<2x128xf32> to vector<2x32xf32>
    %cst_77 = arith.constant 5.000000e-01 : f32
    %216 = vector.broadcast %cst_77 : f32 to vector<2x32xf32>
    %217 = arith.mulf %216, %215 : vector<2x32xf32>
    %218 = math.tanh %217 : vector<2x32xf32>
    %cst_78 = arith.constant 5.000000e-01 : f32
    %219 = vector.broadcast %cst_78 : f32 to vector<2x32xf32>
    %220 = arith.mulf %219, %218 : vector<2x32xf32>
    %cst_79 = arith.constant 5.000000e-01 : f32
    %221 = vector.broadcast %cst_79 : f32 to vector<2x32xf32>
    %222 = arith.addf %220, %221 : vector<2x32xf32>
    %223 = vector.extract_strided_slice %206 {offsets = [0, 64], sizes = [2, 32], strides = [1, 1]} : vector<2x128xf32> to vector<2x32xf32>
    %224 = math.tanh %223 : vector<2x32xf32>
    %225 = vector.extract_strided_slice %206 {offsets = [0, 96], sizes = [2, 32], strides = [1, 1]} : vector<2x128xf32> to vector<2x32xf32>
    %cst_80 = arith.constant 5.000000e-01 : f32
    %226 = vector.broadcast %cst_80 : f32 to vector<2x32xf32>
    %227 = arith.mulf %226, %225 : vector<2x32xf32>
    %228 = math.tanh %227 : vector<2x32xf32>
    %cst_81 = arith.constant 5.000000e-01 : f32
    %229 = vector.broadcast %cst_81 : f32 to vector<2x32xf32>
    %230 = arith.mulf %229, %228 : vector<2x32xf32>
    %cst_82 = arith.constant 5.000000e-01 : f32
    %231 = vector.broadcast %cst_82 : f32 to vector<2x32xf32>
    %232 = arith.addf %230, %231 : vector<2x32xf32>
    %233 = arith.mulf %222, %197 : vector<2x32xf32>
    %234 = arith.mulf %214, %224 : vector<2x32xf32>
    %235 = arith.addf %233, %234 : vector<2x32xf32>
    %236 = math.tanh %235 : vector<2x32xf32>
    %237 = arith.mulf %232, %236 : vector<2x32xf32>
    %c6_i32 = arith.constant 6 : i32
    %c2_i32_83 = arith.constant 2 : i32
    %238 = arith.muli %c6_i32, %c2_i32_83 : i32
    %239 = tpu.assume_multiple %238, 2 : i32
    %240 = arith.index_cast %239 : i32 to index
    %c0_84 = arith.constant 0 : index
    %241 = vector.load %arg10[%240, %c0_84] : memref<16x128xf32, #tpu.memory_space<vmem>>, vector<2x128xf32>
    %242 = arith.truncf %237 : vector<2x32xf32> to vector<2x32xbf16>
    %cst_85 = arith.constant dense<0.000000e+00> : vector<2x128xf32>
    %243 = tpu.matmul %242, %7, %cst_85 {dimension_numbers = #tpu.dot_dimension_numbers<[1], [0], [0], [1], [0, 0, 1, 1], [], []>} : vector<2x32xbf16>, vector<32x128xbf16>, vector<2x128xf32> -> vector<2x128xf32>
    %244 = arith.addf %241, %243 : vector<2x128xf32>
    %245 = vector.extract_strided_slice %244 {offsets = [0, 0], sizes = [2, 32], strides = [1, 1]} : vector<2x128xf32> to vector<2x32xf32>
    %cst_86 = arith.constant 5.000000e-01 : f32
    %246 = vector.broadcast %cst_86 : f32 to vector<2x32xf32>
    %247 = arith.mulf %246, %245 : vector<2x32xf32>
    %248 = math.tanh %247 : vector<2x32xf32>
    %cst_87 = arith.constant 5.000000e-01 : f32
    %249 = vector.broadcast %cst_87 : f32 to vector<2x32xf32>
    %250 = arith.mulf %249, %248 : vector<2x32xf32>
    %cst_88 = arith.constant 5.000000e-01 : f32
    %251 = vector.broadcast %cst_88 : f32 to vector<2x32xf32>
    %252 = arith.addf %250, %251 : vector<2x32xf32>
    %253 = vector.extract_strided_slice %244 {offsets = [0, 32], sizes = [2, 32], strides = [1, 1]} : vector<2x128xf32> to vector<2x32xf32>
    %cst_89 = arith.constant 5.000000e-01 : f32
    %254 = vector.broadcast %cst_89 : f32 to vector<2x32xf32>
    %255 = arith.mulf %254, %253 : vector<2x32xf32>
    %256 = math.tanh %255 : vector<2x32xf32>
    %cst_90 = arith.constant 5.000000e-01 : f32
    %257 = vector.broadcast %cst_90 : f32 to vector<2x32xf32>
    %258 = arith.mulf %257, %256 : vector<2x32xf32>
    %cst_91 = arith.constant 5.000000e-01 : f32
    %259 = vector.broadcast %cst_91 : f32 to vector<2x32xf32>
    %260 = arith.addf %258, %259 : vector<2x32xf32>
    %261 = vector.extract_strided_slice %244 {offsets = [0, 64], sizes = [2, 32], strides = [1, 1]} : vector<2x128xf32> to vector<2x32xf32>
    %262 = math.tanh %261 : vector<2x32xf32>
    %263 = vector.extract_strided_slice %244 {offsets = [0, 96], sizes = [2, 32], strides = [1, 1]} : vector<2x128xf32> to vector<2x32xf32>
    %cst_92 = arith.constant 5.000000e-01 : f32
    %264 = vector.broadcast %cst_92 : f32 to vector<2x32xf32>
    %265 = arith.mulf %264, %263 : vector<2x32xf32>
    %266 = math.tanh %265 : vector<2x32xf32>
    %cst_93 = arith.constant 5.000000e-01 : f32
    %267 = vector.broadcast %cst_93 : f32 to vector<2x32xf32>
    %268 = arith.mulf %267, %266 : vector<2x32xf32>
    %cst_94 = arith.constant 5.000000e-01 : f32
    %269 = vector.broadcast %cst_94 : f32 to vector<2x32xf32>
    %270 = arith.addf %268, %269 : vector<2x32xf32>
    %271 = arith.mulf %260, %235 : vector<2x32xf32>
    %272 = arith.mulf %252, %262 : vector<2x32xf32>
    %273 = arith.addf %271, %272 : vector<2x32xf32>
    %274 = math.tanh %273 : vector<2x32xf32>
    %275 = arith.mulf %270, %274 : vector<2x32xf32>
    %c7_i32 = arith.constant 7 : i32
    %c2_i32_95 = arith.constant 2 : i32
    %276 = arith.muli %c7_i32, %c2_i32_95 : i32
    %277 = tpu.assume_multiple %276, 2 : i32
    %278 = arith.index_cast %277 : i32 to index
    %c0_96 = arith.constant 0 : index
    %279 = vector.load %arg10[%278, %c0_96] : memref<16x128xf32, #tpu.memory_space<vmem>>, vector<2x128xf32>
    %280 = arith.truncf %275 : vector<2x32xf32> to vector<2x32xbf16>
    %cst_97 = arith.constant dense<0.000000e+00> : vector<2x128xf32>
    %281 = tpu.matmul %280, %7, %cst_97 {dimension_numbers = #tpu.dot_dimension_numbers<[1], [0], [0], [1], [0, 0, 1, 1], [], []>} : vector<2x32xbf16>, vector<32x128xbf16>, vector<2x128xf32> -> vector<2x128xf32>
    %282 = arith.addf %279, %281 : vector<2x128xf32>
    %283 = vector.extract_strided_slice %282 {offsets = [0, 0], sizes = [2, 32], strides = [1, 1]} : vector<2x128xf32> to vector<2x32xf32>
    %cst_98 = arith.constant 5.000000e-01 : f32
    %284 = vector.broadcast %cst_98 : f32 to vector<2x32xf32>
    %285 = arith.mulf %284, %283 : vector<2x32xf32>
    %286 = math.tanh %285 : vector<2x32xf32>
    %cst_99 = arith.constant 5.000000e-01 : f32
    %287 = vector.broadcast %cst_99 : f32 to vector<2x32xf32>
    %288 = arith.mulf %287, %286 : vector<2x32xf32>
    %cst_100 = arith.constant 5.000000e-01 : f32
    %289 = vector.broadcast %cst_100 : f32 to vector<2x32xf32>
    %290 = arith.addf %288, %289 : vector<2x32xf32>
    %291 = vector.extract_strided_slice %282 {offsets = [0, 32], sizes = [2, 32], strides = [1, 1]} : vector<2x128xf32> to vector<2x32xf32>
    %cst_101 = arith.constant 5.000000e-01 : f32
    %292 = vector.broadcast %cst_101 : f32 to vector<2x32xf32>
    %293 = arith.mulf %292, %291 : vector<2x32xf32>
    %294 = math.tanh %293 : vector<2x32xf32>
    %cst_102 = arith.constant 5.000000e-01 : f32
    %295 = vector.broadcast %cst_102 : f32 to vector<2x32xf32>
    %296 = arith.mulf %295, %294 : vector<2x32xf32>
    %cst_103 = arith.constant 5.000000e-01 : f32
    %297 = vector.broadcast %cst_103 : f32 to vector<2x32xf32>
    %298 = arith.addf %296, %297 : vector<2x32xf32>
    %299 = vector.extract_strided_slice %282 {offsets = [0, 64], sizes = [2, 32], strides = [1, 1]} : vector<2x128xf32> to vector<2x32xf32>
    %300 = math.tanh %299 : vector<2x32xf32>
    %301 = vector.extract_strided_slice %282 {offsets = [0, 96], sizes = [2, 32], strides = [1, 1]} : vector<2x128xf32> to vector<2x32xf32>
    %cst_104 = arith.constant 5.000000e-01 : f32
    %302 = vector.broadcast %cst_104 : f32 to vector<2x32xf32>
    %303 = arith.mulf %302, %301 : vector<2x32xf32>
    %304 = math.tanh %303 : vector<2x32xf32>
    %cst_105 = arith.constant 5.000000e-01 : f32
    %305 = vector.broadcast %cst_105 : f32 to vector<2x32xf32>
    %306 = arith.mulf %305, %304 : vector<2x32xf32>
    %cst_106 = arith.constant 5.000000e-01 : f32
    %307 = vector.broadcast %cst_106 : f32 to vector<2x32xf32>
    %308 = arith.addf %306, %307 : vector<2x32xf32>
    %309 = arith.mulf %298, %273 : vector<2x32xf32>
    %310 = arith.mulf %290, %300 : vector<2x32xf32>
    %311 = arith.addf %309, %310 : vector<2x32xf32>
    %312 = math.tanh %311 : vector<2x32xf32>
    %313 = arith.mulf %308, %312 : vector<2x32xf32>
    %c8_i32 = arith.constant 8 : i32
    %c14 = arith.constant 14 : index
    %c0_107 = arith.constant 0 : index
    %314 = vector.load %arg0[%c14, %c0_107] : memref<16x16xbf16, #tpu.memory_space<vmem>>, vector<2x16xbf16>
    %c0_108 = arith.constant 0 : index
    %c0_109 = arith.constant 0 : index
    %315 = vector.load %arg4[%c0_108, %c0_109] : memref<16x128xbf16, #tpu.memory_space<vmem>>, vector<16x128xbf16>
    %cst_110 = arith.constant dense<0.000000e+00> : vector<2x128xf32>
    %316 = tpu.matmul %314, %315, %cst_110 {dimension_numbers = #tpu.dot_dimension_numbers<[1], [0], [0], [1], [0, 0, 1, 1], [], []>} : vector<2x16xbf16>, vector<16x128xbf16>, vector<2x128xf32> -> vector<2x128xf32>
    %c0_111 = arith.constant 0 : index
    %c0_112 = arith.constant 0 : index
    %317 = vector.load %arg5[%c0_111, %c0_112] : memref<1x128xf32, #tpu.memory_space<vmem>>, vector<1x128xf32>
    %318 = vector.broadcast %317 : vector<1x128xf32> to vector<2x128xf32>
    %319 = arith.addf %316, %318 : vector<2x128xf32>
    %320 = vector.extract_strided_slice %319 {offsets = [0, 0], sizes = [2, 32], strides = [1, 1]} : vector<2x128xf32> to vector<2x32xf32>
    %cst_113 = arith.constant 5.000000e-01 : f32
    %321 = vector.broadcast %cst_113 : f32 to vector<2x32xf32>
    %322 = arith.mulf %321, %320 : vector<2x32xf32>
    %323 = math.tanh %322 : vector<2x32xf32>
    %cst_114 = arith.constant 5.000000e-01 : f32
    %324 = vector.broadcast %cst_114 : f32 to vector<2x32xf32>
    %325 = arith.mulf %324, %323 : vector<2x32xf32>
    %cst_115 = arith.constant 5.000000e-01 : f32
    %326 = vector.broadcast %cst_115 : f32 to vector<2x32xf32>
    %327 = arith.addf %325, %326 : vector<2x32xf32>
    %328 = vector.extract_strided_slice %319 {offsets = [0, 64], sizes = [2, 32], strides = [1, 1]} : vector<2x128xf32> to vector<2x32xf32>
    %329 = math.tanh %328 : vector<2x32xf32>
    %330 = vector.extract_strided_slice %319 {offsets = [0, 96], sizes = [2, 32], strides = [1, 1]} : vector<2x128xf32> to vector<2x32xf32>
    %cst_116 = arith.constant 5.000000e-01 : f32
    %331 = vector.broadcast %cst_116 : f32 to vector<2x32xf32>
    %332 = arith.mulf %331, %330 : vector<2x32xf32>
    %333 = math.tanh %332 : vector<2x32xf32>
    %cst_117 = arith.constant 5.000000e-01 : f32
    %334 = vector.broadcast %cst_117 : f32 to vector<2x32xf32>
    %335 = arith.mulf %334, %333 : vector<2x32xf32>
    %cst_118 = arith.constant 5.000000e-01 : f32
    %336 = vector.broadcast %cst_118 : f32 to vector<2x32xf32>
    %337 = arith.addf %335, %336 : vector<2x32xf32>
    %338 = arith.mulf %327, %329 : vector<2x32xf32>
    %339 = math.tanh %338 : vector<2x32xf32>
    %340 = arith.mulf %337, %339 : vector<2x32xf32>
    %341 = arith.truncf %313 : vector<2x32xf32> to vector<2x32xbf16>
    %c0_119 = arith.constant 0 : index
    %c0_120 = arith.constant 0 : index
    %342 = vector.load %arg6[%c0_119, %c0_120] : memref<32x16xbf16, #tpu.memory_space<vmem>>, vector<32x16xbf16>
    %cst_121 = arith.constant dense<0.000000e+00> : vector<2x16xf32>
    %343 = tpu.matmul %341, %342, %cst_121 {dimension_numbers = #tpu.dot_dimension_numbers<[1], [0], [0], [1], [0, 0, 1, 1], [], []>} : vector<2x32xbf16>, vector<32x16xbf16>, vector<2x16xf32> -> vector<2x16xf32>
    %344 = arith.truncf %340 : vector<2x32xf32> to vector<2x32xbf16>
    %c0_122 = arith.constant 0 : index
    %c0_123 = arith.constant 0 : index
    %345 = vector.load %arg7[%c0_122, %c0_123] : memref<32x16xbf16, #tpu.memory_space<vmem>>, vector<32x16xbf16>
    %cst_124 = arith.constant dense<0.000000e+00> : vector<2x16xf32>
    %346 = tpu.matmul %344, %345, %cst_124 {dimension_numbers = #tpu.dot_dimension_numbers<[1], [0], [0], [1], [0, 0, 1, 1], [], []>} : vector<2x32xbf16>, vector<32x16xbf16>, vector<2x16xf32> -> vector<2x16xf32>
    %347 = arith.addf %343, %346 : vector<2x16xf32>
    %c0_125 = arith.constant 0 : index
    %c0_126 = arith.constant 0 : index
    %348 = vector.load %arg8[%c0_125, %c0_126] : memref<1x16xf32, #tpu.memory_space<vmem>>, vector<1x16xf32>
    %349 = vector.broadcast %348 : vector<1x16xf32> to vector<2x16xf32>
    %350 = arith.addf %347, %349 : vector<2x16xf32>
    %c0_127 = arith.constant 0 : index
    %c0_128 = arith.constant 0 : index
    %351 = vector.load %arg9[%c0_127, %c0_128] : memref<2x16xf32, #tpu.memory_space<vmem>>, vector<2x16xf32>
    tpu.vector_store %arg9[%c0_127, %c0_128], %350 {strides = array<i32>} : memref<2x16xf32, #tpu.memory_space<vmem>>, vector<2x16xf32>,
    return
  }
}

</mosaic_0001>

<llo_original>
// kernel: tpu_custom_call.1
$region0: #{tpu_custom_call.1}
  #allocation0 [shape = 'u32[]', space=smem, size = 0x4, offset = 0x4, fixed_abs, tag = 'smem constant byte address 0x4 - core index']
  #allocation1 [shape = 'u32[72,128]{1,0:T(1,128)}', space=vmem, size = 0x9000, scoped, tag = 'internal scratch']
  #allocation2 [shape = 'f32[16,128]{1,0:T(8,128)}', space=vmem, size = 0x2000, scoped, tag = 'scratch operand']
  %s0 = inlined_call_operand.vmem [shape: bf16[16,16], index: 0, kind: input, shape index: {}]
  %s1 = inlined_call_operand.vmem [shape: bf16[16,128], index: 1, kind: input, shape index: {}]
  %s2 = inlined_call_operand.vmem [shape: bf16[32,128], index: 2, kind: input, shape index: {}]
  %s3 = inlined_call_operand.vmem [shape: f32[1,128], index: 3, kind: input, shape index: {}]
  %s4 = inlined_call_operand.vmem [shape: bf16[16,128], index: 4, kind: input, shape index: {}]
  %s5 = inlined_call_operand.vmem [shape: f32[1,128], index: 5, kind: input, shape index: {}]
  %s6 = inlined_call_operand.vmem [shape: bf16[32,16], index: 6, kind: input, shape index: {}]
  %s7 = inlined_call_operand.vmem [shape: bf16[32,16], index: 7, kind: input, shape index: {}]
  %s8 = inlined_call_operand.vmem [shape: f32[1,16], index: 8, kind: input, shape index: {}]
  %s9 = inlined_call_operand.hbm [shape: f32[2,16], index: 9, kind: output, shape index: {}]
  %s10 = sld [smem:[#allocation0]]
  $region46: #{tpu_custom_call.1} parent=0
    _
  %s12 = ssub.s32 1, %s10
  %s13 = scalar_select 0, %s12, %s10
  $region1: #{tpu_custom_call.1} parent=0
    #allocation3 [shape = 'u8[1024]{0}', space=vmem, size = 0x400, scoped, tag = 'output window, operand 0, single buffered']
    #allocation4 [shape = 's32[1]{0}', space=sflag, size = 0x4, scoped, tag = 'scoped memory for tpu_custom_call.1']
    %14 = vsyncpa [#allocation4], 0
    // Predicated region
    $region2: #{tpu_custom_call.1} parent=1 // pred_check
      _
    $region3: #{tpu_custom_call.1} parent=1 // pred_check_branch
      %16 = sbr.rel (0) target = $region5
    $region4: #{tpu_custom_call.1} parent=1 // pred_region
      _
    $region5: #{tpu_custom_call.1} parent=1 // pred_fallthru
      _
    // Predicated region
    $region6: #{tpu_custom_call.1} parent=1 // pred_check
      _
    $region7: #{tpu_custom_call.1} parent=1 // pred_check_branch
      %18 = sbr.rel (0) target = $region9
    $region8: #{tpu_custom_call.1} parent=1 // pred_region
      _
    $region9: #{tpu_custom_call.1} parent=1 // pred_fallthru
      _
    // Predicated region
    $region10: #{tpu_custom_call.1} parent=1 // pred_check
      _
    $region11: #{tpu_custom_call.1} parent=1 // pred_check_branch
      %20 = sbr.rel (0) target = $region13
    $region12: #{tpu_custom_call.1} parent=1 // pred_region
      _
    $region13: #{tpu_custom_call.1} parent=1 // pred_fallthru
      _
    // Predicated region
    $region14: #{tpu_custom_call.1} parent=1 // pred_check
      _
    $region15: #{tpu_custom_call.1} parent=1 // pred_check_branch
      %22 = sbr.rel (0) target = $region17
    $region16: #{tpu_custom_call.1} parent=1 // pred_region
      _
    $region17: #{tpu_custom_call.1} parent=1 // pred_fallthru
      _
    // Predicated region
    $region18: #{tpu_custom_call.1} parent=1 // pred_check
      _
    $region19: #{tpu_custom_call.1} parent=1 // pred_check_branch
      %24 = sbr.rel (0) target = $region21
    $region20: #{tpu_custom_call.1} parent=1 // pred_region
      _
    $region21: #{tpu_custom_call.1} parent=1 // pred_fallthru
      _
    // Predicated region
    $region22: #{tpu_custom_call.1} parent=1 // pred_check
      _
    $region23: #{tpu_custom_call.1} parent=1 // pred_check_branch
      %26 = sbr.rel (0) target = $region25
    $region24: #{tpu_custom_call.1} parent=1 // pred_region
      _
    $region25: #{tpu_custom_call.1} parent=1 // pred_fallthru
      _
    // Predicated region
    $region26: #{tpu_custom_call.1} parent=1 // pred_check
      _
    $region27: #{tpu_custom_call.1} parent=1 // pred_check_branch
      %28 = sbr.rel (0) target = $region29
    $region28: #{tpu_custom_call.1} parent=1 // pred_region
      _
    $region29: #{tpu_custom_call.1} parent=1 // pred_fallthru
      _
    // Predicated region
    $region30: #{tpu_custom_call.1} parent=1 // pred_check
      _
    $region31: #{tpu_custom_call.1} parent=1 // pred_check_branch
      %30 = sbr.rel (0) target = $region33
    $region32: #{tpu_custom_call.1} parent=1 // pred_region
      _
    $region33: #{tpu_custom_call.1} parent=1 // pred_fallthru
      _
    // Predicated region
    $region34: #{tpu_custom_call.1} parent=1 // pred_check
      _
    $region35: #{tpu_custom_call.1} parent=1 // pred_check_branch
      %32 = sbr.rel (0) target = $region37
    $region36: #{tpu_custom_call.1} parent=1 // pred_region
      _
    $region37: #{tpu_custom_call.1} parent=1 // pred_fallthru
      _
    %v34 = vld [vmem:[%s0] sm:$0xf]
    %v35 = vld [vmem:[%s0 + $0x4] sm:$0xf]
    %v36 = vld [vmem:[%s1] sm:$0xf]
    %v37 = vld [vmem:[%s1 + $0x4] sm:$0xf]
    %v38 = vld [vmem:[%s3] sm:$0x1]
    %v40 = vperm.slane %v38, 0
    %v44 = vunpack.c.l.b16 %v34
    %v45 = vunpack.c.l.b16 %v35
    %v46 = vpack.c.b16 %v45, %v44
    %v49 = vunpack.c.l.b16 %v36
    %v50 = vunpack.c.l.b16 %v37
    %v51 = vpack.c.b16 %v50, %v49
    %vm53 = vcmask 130048
    %v55 = vsel %vm53, %v46, 0
    %57 = vmatpush.bf16.msra.mxu0 0
    %58 = vmatpush.bf16.msra.mxu0 0
    %59 = vmatpush.bf16.msra.mxu0 0
    %60 = vmatpush.bf16.msra.mxu0 0
    %61 = vmatpush.bf16.msra.mxu0 0
    %62 = vmatpush.bf16.msra.mxu0 0
    %63 = vmatpush.bf16.msra.mxu0 0
    %64 = vmatpush.bf16.msra.mxu0 %v51
    %65 = vmatmul.bf16.gmra.mxu0 %v55
    %v66 = vpop.f32.mrf.mxu0
    %v67 = vadd.f32 %v40, %v66
    %v68 = vpop.f32.mrf.mxu0
    %v69 = vadd.f32 %v40, %v68
    %70 = vdwg.mxu0
    %71 = vst [vmem:[#allocation2] sm:$0xff] %v67
    %72 = vst [vmem:[#allocation2 + $0x8] sm:$0xff] %v69
    %v73 = vld [vmem:[%s2] sm:$0xf]
    %v74 = vld [vmem:[%s2 + $0x4] sm:$0xf]
    %v75 = vld [vmem:[%s2 + $0x8] sm:$0xf]
    %v76 = vld [vmem:[%s2 + $0xc] sm:$0xf]
    %v77 = vld [vmem:[#allocation2] sm:$0x3]
    %v82 = vunpack.c.l.b16 %v73
    %v83 = vunpack.c.l.b16 %v74
    %v84 = vunpack.c.l.b16 %v75
    %v85 = vunpack.c.l.b16 %v76
    %v86 = vpack.c.b16 %v83, %v82
    %v87 = vpack.c.b16 %v85, %v84
    %vm90 = vcmask 261120
    %v92 = vsel %vm90, 0, 0
    %94 = vmatpush.bf16.msra.mxu0 0
    %95 = vmatpush.bf16.msra.mxu0 0
    %96 = vmatpush.bf16.msra.mxu0 0
    %97 = vmatpush.bf16.msra.mxu0 0
    %98 = vmatpush.bf16.msra.mxu0 0
    %99 = vmatpush.bf16.msra.mxu0 0
    %100 = vmatpush.bf16.msra.mxu0 %v87
    %101 = vmatpush.bf16.msra.mxu0 %v86
    %102 = vmatmul.bf16.gmra.mxu0 %v92
    %v103 = vpop.f32.mrf.mxu0
    %v104 = vadd.f32 0.0, %v103
    %v105 = vpop.f32.mrf.mxu0
    %106 = vdwg.mxu0
    %v107 = vadd.f32 %v77, %v104
    %v108 = vmul.f32 %v107, 0.5
    %v109 = vtanh.pop %v108
    %v110 = vmul.f32 %v109, 0.5
    %v111 = vadd.f32 %v110, 0.5
    %v112 = vtanh.pop %v107
    %v113 = vmul.f32 %v111, 0.0
    %115 = vrot.lane.b32.xlu0 %v112, 64
    %v116 = vpop.permute.xlu0 %115
    %v118 = vmul.f32 %v111, %v116
    %120 = vrot.lane.b32.xlu0 %v118, 32
    %v121 = vpop.permute.xlu0 %120
    %v123 = vadd.f32 %v113, %v121
    %v124 = vtanh.pop %v123
    %126 = vrot.lane.b32.xlu0 %v124, 64
    %v127 = vpop.permute.xlu0 %126
    %v129 = vmul.f32 %v111, %v127
    %s130 = scalar_lea.vmem [#allocation2], 2
    %v131 = vld [vmem:[%s130] sm:$0x3]
    %v132 = vpack.c.bf16 %v129, %v129
    %134 = vrot.lane.b32.xlu0 %v132, 32
    %v135 = vpop.permute.xlu0 %134
    %v137 = vsel %vm90, %v135, 0
    %139 = vmatpush.bf16.msra.mxu0 0
    %140 = vmatpush.bf16.msra.mxu0 0
    %141 = vmatpush.bf16.msra.mxu0 0
    %142 = vmatpush.bf16.msra.mxu0 0
    %143 = vmatpush.bf16.msra.mxu0 0
    %144 = vmatpush.bf16.msra.mxu0 0
    %145 = vmatpush.bf16.msra.mxu0 %v87
    %146 = vmatpush.bf16.msra.mxu0 %v86
    %147 = vmatmul.bf16.gmra.mxu0 %v137
    %v148 = vpop.f32.mrf.mxu0
    %v149 = vadd.f32 0.0, %v148
    %v150 = vpop.f32.mrf.mxu0
    %151 = vdwg.mxu0
    %v152 = vadd.f32 %v131, %v149
    %v153 = vmul.f32 %v152, 0.5
    %v154 = vtanh.pop %v153
    %v155 = vmul.f32 %v154, 0.5
    %v156 = vadd.f32 %v155, 0.5
    %v157 = vtanh.pop %v152
    %v158 = vmul.f32 %v156, %v123
    %160 = vrot.lane.b32.xlu0 %v157, 64
    %v161 = vpop.permute.xlu0 %160
    %v163 = vmul.f32 %v156, %v161
    %165 = vrot.lane.b32.xlu0 %v163, 32
    %v166 = vpop.permute.xlu0 %165
    %v168 = vadd.f32 %v158, %v166
    %v169 = vtanh.pop %v168
    %171 = vrot.lane.b32.xlu0 %v169, 64
    %v172 = vpop.permute.xlu0 %171
    %v174 = vmul.f32 %v156, %v172
    %s175 = scalar_lea.vmem [#allocation2], 4
    %v176 = vld [vmem:[%s175] sm:$0x3]
    %v177 = vpack.c.bf16 %v174, %v174
    %179 = vrot.lane.b32.xlu0 %v177, 32
    %v180 = vpop.permute.xlu0 %179
    %v182 = vsel %vm90, %v180, 0
    %184 = vmatpush.bf16.msra.mxu0 0
    %185 = vmatpush.bf16.msra.mxu0 0
    %186 = vmatpush.bf16.msra.mxu0 0
    %187 = vmatpush.bf16.msra.mxu0 0
    %188 = vmatpush.bf16.msra.mxu0 0
    %189 = vmatpush.bf16.msra.mxu0 0
    %190 = vmatpush.bf16.msra.mxu0 %v87
    %191 = vmatpush.bf16.msra.mxu0 %v86
    %192 = vmatmul.bf16.gmra.mxu0 %v182
    %v193 = vpop.f32.mrf.mxu0
    %v194 = vadd.f32 0.0, %v193
    %v195 = vpop.f32.mrf.mxu0
    %196 = vdwg.mxu0
    %v197 = vadd.f32 %v176, %v194
    %v198 = vmul.f32 %v197, 0.5
    %v199 = vtanh.pop %v198
    %v200 = vmul.f32 %v199, 0.5
    %v201 = vadd.f32 %v200, 0.5
    %v202 = vtanh.pop %v197
    %v203 = vmul.f32 %v201, %v168
    %205 = vrot.lane.b32.xlu0 %v202, 64
    %v206 = vpop.permute.xlu0 %205
    %v208 = vmul.f32 %v201, %v206
    %210 = vrot.lane.b32.xlu0 %v208, 32
    %v211 = vpop.permute.xlu0 %210
    %v213 = vadd.f32 %v203, %v211
    %v214 = vtanh.pop %v213
    %216 = vrot.lane.b32.xlu0 %v214, 64
    %v217 = vpop.permute.xlu0 %216
    %v219 = vmul.f32 %v201, %v217
    %s220 = scalar_lea.vmem [#allocation2], 6
    %v221 = vld [vmem:[%s220] sm:$0x3]
    %v222 = vpack.c.bf16 %v219, %v219
    %224 = vrot.lane.b32.xlu0 %v222, 32
    %v225 = vpop.permute.xlu0 %224
    %v227 = vsel %vm90, %v225, 0
    %229 = vmatpush.bf16.msra.mxu0 0
    %230 = vmatpush.bf16.msra.mxu0 0
    %231 = vmatpush.bf16.msra.mxu0 0
    %232 = vmatpush.bf16.msra.mxu0 0
    %233 = vmatpush.bf16.msra.mxu0 0
    %234 = vmatpush.bf16.msra.mxu0 0
    %235 = vmatpush.bf16.msra.mxu0 %v87
    %236 = vmatpush.bf16.msra.mxu0 %v86
    %237 = vmatmul.bf16.gmra.mxu0 %v227
    %v238 = vpop.f32.mrf.mxu0
    %v239 = vadd.f32 0.0, %v238
    %v240 = vpop.f32.mrf.mxu0
    %241 = vdwg.mxu0
    %v242 = vadd.f32 %v221, %v239
    %v243 = vmul.f32 %v242, 0.5
    %v244 = vtanh.pop %v243
    %v245 = vmul.f32 %v244, 0.5
    %v246 = vadd.f32 %v245, 0.5
    %v247 = vtanh.pop %v242
    %v248 = vmul.f32 %v246, %v213
    %250 = vrot.lane.b32.xlu0 %v247, 64
    %v251 = vpop.permute.xlu0 %250
    %v253 = vmul.f32 %v246, %v251
    %255 = vrot.lane.b32.xlu0 %v253, 32
    %v256 = vpop.permute.xlu0 %255
    %v258 = vadd.f32 %v248, %v256
    %v259 = vtanh.pop %v258
    %261 = vrot.lane.b32.xlu0 %v259, 64
    %v262 = vpop.permute.xlu0 %261
    %v264 = vmul.f32 %v246, %v262
    %s265 = scalar_lea.vmem [#allocation2], 8
    %v266 = vld [vmem:[%s265] sm:$0x3]
    %v267 = vpack.c.bf16 %v264, %v264
    %269 = vrot.lane.b32.xlu0 %v267, 32
    %v270 = vpop.permute.xlu0 %269
    %v272 = vsel %vm90, %v270, 0
    %274 = vmatpush.bf16.msra.mxu0 0
    %275 = vmatpush.bf16.msra.mxu0 0
    %276 = vmatpush.bf16.msra.mxu0 0
    %277 = vmatpush.bf16.msra.mxu0 0
    %278 = vmatpush.bf16.msra.mxu0 0
    %279 = vmatpush.bf16.msra.mxu0 0
    %280 = vmatpush.bf16.msra.mxu0 %v87
    %281 = vmatpush.bf16.msra.mxu0 %v86
    %282 = vmatmul.bf16.gmra.mxu0 %v272
    %v283 = vpop.f32.mrf.mxu0
    %v284 = vadd.f32 0.0, %v283
    %v285 = vpop.f32.mrf.mxu0
    %286 = vdwg.mxu0
    %v287 = vadd.f32 %v266, %v284
    %v288 = vmul.f32 %v287, 0.5
    %v289 = vtanh.pop %v288
    %v290 = vmul.f32 %v289, 0.5
    %v291 = vadd.f32 %v290, 0.5
    %v292 = vtanh.pop %v287
    %v293 = vmul.f32 %v291, %v258
    %295 = vrot.lane.b32.xlu0 %v292, 64
    %v296 = vpop.permute.xlu0 %295
    %v298 = vmul.f32 %v291, %v296
    %300 = vrot.lane.b32.xlu0 %v298, 32
    %v301 = vpop.permute.xlu0 %300
    %v303 = vadd.f32 %v293, %v301
    %v304 = vtanh.pop %v303
    %306 = vrot.lane.b32.xlu0 %v304, 64
    %v307 = vpop.permute.xlu0 %306
    %v309 = vmul.f32 %v291, %v307
    %s310 = scalar_lea.vmem [#allocation2], 10
    %v311 = vld [vmem:[%s310] sm:$0x3]
    %v312 = vpack.c.bf16 %v309, %v309
    %314 = vrot.lane.b32.xlu0 %v312, 32
    %v315 = vpop.permute.xlu0 %314
    %v317 = vsel %vm90, %v315, 0
    %319 = vmatpush.bf16.msra.mxu0 0
    %320 = vmatpush.bf16.msra.mxu0 0
    %321 = vmatpush.bf16.msra.mxu0 0
    %322 = vmatpush.bf16.msra.mxu0 0
    %323 = vmatpush.bf16.msra.mxu0 0
    %324 = vmatpush.bf16.msra.mxu0 0
    %325 = vmatpush.bf16.msra.mxu0 %v87
    %326 = vmatpush.bf16.msra.mxu0 %v86
    %327 = vmatmul.bf16.gmra.mxu0 %v317
    %v328 = vpop.f32.mrf.mxu0
    %v329 = vadd.f32 0.0, %v328
    %v330 = vpop.f32.mrf.mxu0
    %331 = vdwg.mxu0
    %v332 = vadd.f32 %v311, %v329
    %v333 = vmul.f32 %v332, 0.5
    %v334 = vtanh.pop %v333
    %v335 = vmul.f32 %v334, 0.5
    %v336 = vadd.f32 %v335, 0.5
    %v337 = vtanh.pop %v332
    %v338 = vmul.f32 %v336, %v303
    %340 = vrot.lane.b32.xlu0 %v337, 64
    %v341 = vpop.permute.xlu0 %340
    %v343 = vmul.f32 %v336, %v341
    %345 = vrot.lane.b32.xlu0 %v343, 32
    %v346 = vpop.permute.xlu0 %345
    %v348 = vadd.f32 %v338, %v346
    %v349 = vtanh.pop %v348
    %351 = vrot.lane.b32.xlu0 %v349, 64
    %v352 = vpop.permute.xlu0 %351
    %v354 = vmul.f32 %v336, %v352
    %s355 = scalar_lea.vmem [#allocation2], 12
    %v356 = vld [vmem:[%s355] sm:$0x3]
    %v357 = vpack.c.bf16 %v354, %v354
    %359 = vrot.lane.b32.xlu0 %v357, 32
    %v360 = vpop.permute.xlu0 %359
    %v362 = vsel %vm90, %v360, 0
    %364 = vmatpush.bf16.msra.mxu0 0
    %365 = vmatpush.bf16.msra.mxu0 0
    %366 = vmatpush.bf16.msra.mxu0 0
    %367 = vmatpush.bf16.msra.mxu0 0
    %368 = vmatpush.bf16.msra.mxu0 0
    %369 = vmatpush.bf16.msra.mxu0 0
    %370 = vmatpush.bf16.msra.mxu0 %v87
    %371 = vmatpush.bf16.msra.mxu0 %v86
    %372 = vmatmul.bf16.gmra.mxu0 %v362
    %v373 = vpop.f32.mrf.mxu0
    %v374 = vadd.f32 0.0, %v373
    %v375 = vpop.f32.mrf.mxu0
    %376 = vdwg.mxu0
    %v377 = vadd.f32 %v356, %v374
    %v378 = vmul.f32 %v377, 0.5
    %v379 = vtanh.pop %v378
    %v380 = vmul.f32 %v379, 0.5
    %v381 = vadd.f32 %v380, 0.5
    %v382 = vtanh.pop %v377
    %v383 = vmul.f32 %v381, %v348
    %385 = vrot.lane.b32.xlu0 %v382, 64
    %v386 = vpop.permute.xlu0 %385
    %v388 = vmul.f32 %v381, %v386
    %390 = vrot.lane.b32.xlu0 %v388, 32
    %v391 = vpop.permute.xlu0 %390
    %v393 = vadd.f32 %v383, %v391
    %v394 = vtanh.pop %v393
    %396 = vrot.lane.b32.xlu0 %v394, 64
    %v397 = vpop.permute.xlu0 %396
    %v399 = vmul.f32 %v381, %v397
    %s400 = scalar_lea.vmem [#allocation2], 14
    %v401 = vld [vmem:[%s400] sm:$0x3]
    %v402 = vpack.c.bf16 %v399, %v399
    %404 = vrot.lane.b32.xlu0 %v402, 32
    %v405 = vpop.permute.xlu0 %404
    %v407 = vsel %vm90, %v405, 0
    %409 = vmatpush.bf16.msra.mxu0 0
    %410 = vmatpush.bf16.msra.mxu0 0
    %411 = vmatpush.bf16.msra.mxu0 0
    %412 = vmatpush.bf16.msra.mxu0 0
    %413 = vmatpush.bf16.msra.mxu0 0
    %414 = vmatpush.bf16.msra.mxu0 0
    %415 = vmatpush.bf16.msra.mxu0 %v87
    %416 = vmatpush.bf16.msra.mxu0 %v86
    %417 = vmatmul.bf16.gmra.mxu0 %v407
    %v418 = vpop.f32.mrf.mxu0
    %v419 = vadd.f32 0.0, %v418
    %v420 = vpop.f32.mrf.mxu0
    %421 = vdwg.mxu0
    %v422 = vadd.f32 %v401, %v419
    %v423 = vmul.f32 %v422, 0.5
    %v424 = vtanh.pop %v423
    %v425 = vmul.f32 %v424, 0.5
    %v426 = vadd.f32 %v425, 0.5
    %v427 = vtanh.pop %v422
    %v428 = vmul.f32 %v426, %v393
    %430 = vrot.lane.b32.xlu0 %v427, 64
    %v431 = vpop.permute.xlu0 %430
    %v433 = vmul.f32 %v426, %v431
    %435 = vrot.lane.b32.xlu0 %v433, 32
    %v436 = vpop.permute.xlu0 %435
    %v438 = vadd.f32 %v428, %v436
    %v439 = vtanh.pop %v438
    %441 = vrot.lane.b32.xlu0 %v439, 64
    %v442 = vpop.permute.xlu0 %441
    %v444 = vmul.f32 %v426, %v442
    %v445 = vld [vmem:[%s0 + $0x4] sm:$0x8]
    %v446 = vld [vmem:[%s4] sm:$0xf]
    %v447 = vld [vmem:[%s4 + $0x4] sm:$0xf]
    %v448 = vld [vmem:[%s5] sm:$0x1]
    %v450 = vperm.slane %v448, 0
    %v453 = vunpack.c.l.b16 %v445
    %v454 = vpack.c.b16 %v453, %v453
    %v455 = vrot.slane %v454, 3
    %v458 = vunpack.c.l.b16 %v446
    %v459 = vunpack.c.l.b16 %v447
    %v460 = vpack.c.b16 %v459, %v458
    %v463 = vsel %vm53, %v455, 0
    %465 = vmatpush.bf16.msra.mxu0 0
    %466 = vmatpush.bf16.msra.mxu0 0
    %467 = vmatpush.bf16.msra.mxu0 0
    %468 = vmatpush.bf16.msra.mxu0 0
    %469 = vmatpush.bf16.msra.mxu0 0
    %470 = vmatpush.bf16.msra.mxu0 0
    %471 = vmatpush.bf16.msra.mxu0 0
    %472 = vmatpush.bf16.msra.mxu0 %v460
    %473 = vmatmul.bf16.gmra.mxu0 %v463
    %v474 = vpop.f32.mrf.mxu0
    %v475 = vadd.f32 %v450, %v474
    %v476 = vpop.f32.mrf.mxu0
    %477 = vdwg.mxu0
    %v478 = vmul.f32 %v475, 0.5
    %v479 = vtanh.pop %v478
    %v480 = vmul.f32 %v479, 0.5
    %v481 = vadd.f32 %v480, 0.5
    %v482 = vtanh.pop %v475
    %484 = vrot.lane.b32.xlu0 %v482, 64
    %v485 = vpop.permute.xlu0 %484
    %v487 = vmul.f32 %v481, %v485
    %v488 = vtanh.pop %v487
    %490 = vrot.lane.b32.xlu0 %v488, 96
    %v491 = vpop.permute.xlu0 %490
    %v493 = vmul.f32 %v481, %v491
    %v494 = vpack.c.bf16 %v444, %v444
    %v495 = vld [vmem:[%s6] sm:$0xf]
    %v496 = vld [vmem:[%s6 + $0x4] sm:$0xf]
    %v497 = vld [vmem:[%s6 + $0x8] sm:$0xf]
    %v498 = vld [vmem:[%s6 + $0xc] sm:$0xf]
    %v499 = vpack.c.bf16 %v493, %v493
    %v500 = vld [vmem:[%s7] sm:$0xf]
    %v501 = vld [vmem:[%s7 + $0x4] sm:$0xf]
    %v502 = vld [vmem:[%s7 + $0x8] sm:$0xf]
    %v503 = vld [vmem:[%s7 + $0xc] sm:$0xf]
    %505 = vrot.lane.b32.xlu0 %v499, 32
    %v506 = vpop.permute.xlu0 %505
    %v511 = vunpack.c.l.b16 %v500
    %v512 = vunpack.c.l.b16 %v501
    %v513 = vunpack.c.l.b16 %v502
    %v514 = vunpack.c.l.b16 %v503
    %v515 = vpack.c.b16 %v512, %v511
    %v516 = vpack.c.b16 %v514, %v513
    %v520 = vsel %vm90, %v506, 0
    %522 = vmatpush.bf16.msra.mxu0 0
    %523 = vmatpush.bf16.msra.mxu0 0
    %524 = vmatpush.bf16.msra.mxu0 0
    %525 = vmatpush.bf16.msra.mxu0 0
    %526 = vmatpush.bf16.msra.mxu0 0
    %527 = vmatpush.bf16.msra.mxu0 0
    %528 = vmatpush.bf16.msra.mxu0 %v516
    %529 = vmatpush.bf16.msra.mxu0 %v515
    %530 = vmatmul.bf16.gmra.mxu0 %v520
    %v531 = vpop.f32.mrf.mxu0
    %v532 = vadd.f32 0.0, %v531
    %v533 = vpop.f32.mrf.mxu0
    %534 = vdwg.mxu0
    %536 = vrot.lane.b32.xlu0 %v494, 32
    %v537 = vpop.permute.xlu0 %536
    %v542 = vunpack.c.l.b16 %v495
    %v543 = vunpack.c.l.b16 %v496
    %v544 = vunpack.c.l.b16 %v497
    %v545 = vunpack.c.l.b16 %v498
    %v546 = vpack.c.b16 %v543, %v542
    %v547 = vpack.c.b16 %v545, %v544
    %v551 = vsel %vm90, %v537, 0
    %553 = vmatpush.bf16.msra.mxu0 0
    %554 = vmatpush.bf16.msra.mxu0 0
    %555 = vmatpush.bf16.msra.mxu0 0
    %556 = vmatpush.bf16.msra.mxu0 0
    %557 = vmatpush.bf16.msra.mxu0 0
    %558 = vmatpush.bf16.msra.mxu0 0
    %559 = vmatpush.bf16.msra.mxu0 %v547
    %560 = vmatpush.bf16.msra.mxu0 %v546
    %561 = vmatmul.bf16.gmra.mxu0 %v551
    %v562 = vpop.f32.mrf.mxu0
    %v563 = vadd.f32 %v532, %v562
    %v564 = vpop.f32.mrf.mxu0
    %565 = vdwg.mxu0
    %v566 = vld [vmem:[%s8] sm:$0x1]
    %v568 = vperm.slane %v566, 0
    %v570 = vadd.f32 %v563, %v568
    %vm571 = vcmask 123904
    %572 = vst.msk [vmem:[#allocation3] sm:$0x3] %vm571, %v570
    // Predicated region
    $region38: #{tpu_custom_call.1} parent=1 // pred_check
      _
    $region39: #{tpu_custom_call.1} parent=1 // pred_check_branch
      %574 = sbr.rel (0) target = $region41
    $region40: #{tpu_custom_call.1} parent=1 // pred_region
      %576 = vsyncadd [#allocation4], 0
      %s578 = sshll.u32 [#allocation3], 4
      %s579 = int_to_ptr.vmem [resolvable:$true] %s578
      %s580 = sshll.u32 %s9, 4
      %s581 = int_to_ptr.hbm [resolvable:$true] %s580
      %583 = dma.vmem_to_hbm [thread:$0]  %s579, 32, %s581, [#allocation4]
    $region41: #{tpu_custom_call.1} parent=1 // pred_fallthru
      _
    // Predicated region
    $region42: #{tpu_custom_call.1} parent=1 // pred_check
      _
    $region43: #{tpu_custom_call.1} parent=1 // pred_check_branch
      %585 = sbr.rel (0) target = $region45
    $region44: #{tpu_custom_call.1} parent=1 // pred_region
      %587 = dma.done [#allocation4], 32
    $region45: #{tpu_custom_call.1} parent=1 // pred_fallthru
      _
    %588 = vsyncpa [#allocation4], 1

</llo_original>
